<compile_context>
chip_gen: v6e
topology: v6e:2x2x1
jax: 0.10.0
libtpu: 0.0.40
codegen_flags: <defaults>
</compile_context>

<pallas_src>
import jax
import jax.numpy as jnp
from jax.experimental import pallas as pl
from jax.experimental.pallas import tpu as pltpu


def dup_cols_kernel(x_ref, o_ref):
    # x_ref: (rows, D) tile in VMEM; o_ref: (rows, 2*D) tile in VMEM.
    # Two contiguous slab stores; no intermediate concatenated value in vregs.
    D = x_ref.shape[-1]
    o_ref[:, :D] = x_ref[...]
    o_ref[:, D:] = x_ref[...]


def model_forward(x):
    """Equivalent of:
        x = torch.cat((x, x), dim=-1)
        x = x.view(x.shape[0], -1)
    """
    B, S, D = x.shape
    R = B * S
    # Layout-preserving merge of the leading dims in the wrapper (free-ish):
    # the kernel works on a dense (R, D) sublane x lane slab.
    x2 = x.reshape(R, D)

    # Row-tile choice:
    #  * tiny / non-8-multiple row counts -> single block equal to the full
    #    array (the (8,128) rule's full-array escape).
    #  * scaled-up -> 512-row tiles (multiple of 8 sublanes), which also stays
    #    well under the ~4-5 MiB input-tile budget for v7x's 64 MiB VMEM as
    #    long as D*4B*512 stays in the low-MiB range.
    if R <= 512 or R % 8 != 0:
        row_tile = R
    else:
        row_tile = 512
    grid = (pl.cdiv(R, row_tile),)

    out2 = pl.pallas_call(
        dup_cols_kernel,
        out_shape=jax.ShapeDtypeStruct((R, 2 * D), x.dtype),
        grid=grid,
        in_specs=[pl.BlockSpec((row_tile, D), lambda i: (i, 0))],
        out_specs=pl.BlockSpec((row_tile, 2 * D), lambda i: (i, 0)),
        compiler_params=pltpu.CompilerParams(
            dimension_semantics=("parallel",)),
    )(x2)

    # (R, 2D) row-major is bit-identical to (B, S*2*D) row-major; this is the
    # final torch .view in the wrapper.
    return out2.reshape(B, S * 2 * D)


if __name__ == "__main__":
    # NOTE: the original module's __init__ does torch.cat((None, None), dim=-1),
    # which is invalid PyTorch and has no effect on forward semantics; ignored.
    key = jax.random.PRNGKey(0)
    x = jax.random.normal(key, (2, 3, 4), dtype=jnp.float32)

    out = jax.block_until_ready(model_forward(x))

    # Reference check with plain JAX.
    ref = jnp.concatenate([x, x], axis=-1).reshape(x.shape[0], -1)
    assert out.shape == (2, 24), out.shape
    assert jnp.allclose(out, ref), "mismatch vs reference"

    print("KERNEL_OK")
</pallas_src>

<mosaic_0001>
module attributes {stable_mosaic.version = 11 : i64} {
  func.func @dup_cols_kernel(%arg0: i32, %arg1: memref<6x4xf32, #tpu.memory_space<vmem>>, %arg2: memref<6x8xf32, #tpu.memory_space<vmem>>) attributes {dimension_semantics = [#tpu.dimension_semantics<parallel>], iteration_bounds = array<i64: 1>, scalar_prefetch = 0 : i64, scratch_operands = 0 : i64, tpu.core_type = #tpu.core_type<tc>, window_params = [{transform_indices = @transform_0, window_bounds = array<i64: 6, 4>}, {transform_indices = @transform_1, window_bounds = array<i64: 6, 8>}]} {
    %c0 = arith.constant 0 : index
    %c0_0 = arith.constant 0 : index
    %0 = vector.load %arg1[%c0, %c0_0] : memref<6x4xf32, #tpu.memory_space<vmem>>, vector<6x4xf32>
    %c0_1 = arith.constant 0 : index
    %c0_2 = arith.constant 0 : index
    %1 = vector.load %arg2[%c0_1, %c0_2] : memref<6x8xf32, #tpu.memory_space<vmem>>, vector<6x4xf32>
    tpu.vector_store %arg2[%c0_1, %c0_2], %0 {strides = array<i32>} : memref<6x8xf32, #tpu.memory_space<vmem>>, vector<6x4xf32>,
    %c0_3 = arith.constant 0 : index
    %c0_4 = arith.constant 0 : index
    %2 = vector.load %arg1[%c0_3, %c0_4] : memref<6x4xf32, #tpu.memory_space<vmem>>, vector<6x4xf32>
    %c0_5 = arith.constant 0 : index
    %c4 = arith.constant 4 : index
    %3 = vector.load %arg2[%c0_5, %c4] : memref<6x8xf32, #tpu.memory_space<vmem>>, vector<6x4xf32>
    tpu.vector_store %arg2[%c0_5, %c4], %2 {strides = array<i32>} : memref<6x8xf32, #tpu.memory_space<vmem>>, vector<6x4xf32>,
    return
  }
  func.func @transform_0(%arg0: i32) -> (i32, i32) {
    %c0_i32 = arith.constant 0 : i32
    %c0_i32_0 = arith.constant 0 : i32
    return %arg0, %c0_i32 : i32, i32
  }
  func.func @transform_1(%arg0: i32) -> (i32, i32) {
    %c0_i32 = arith.constant 0 : i32
    %c0_i32_0 = arith.constant 0 : i32
    return %arg0, %c0_i32 : i32, i32
  }
}

</mosaic_0001>

<llo_original>
// kernel: tpu_custom_call.1
$region0: #{tpu_custom_call.1}
  #allocation0 [shape = 'u32[]', space=smem, size = 0x4, offset = 0x4, fixed_abs, tag = 'smem constant byte address 0x4 - core index']
  #allocation1 [shape = 'u32[144,128]{1,0:T(1,128)}', space=vmem, size = 0x12000, scoped, tag = 'internal scratch']
  %s0 = inlined_call_operand.vmem [shape: f32[6,4], index: 0, kind: input, shape index: {}]
  %s1 = inlined_call_operand.hbm [shape: f32[6,8], index: 1, kind: output, shape index: {}]
  %s2 = sld [smem:[#allocation0]]
  $region14: #{tpu_custom_call.1} parent=0
    _
  %s4 = ssub.s32 1, %s2
  %s5 = scalar_select 0, %s4, %s2
  $region1: #{tpu_custom_call.1} parent=0
    #allocation2 [shape = 'u8[4096]{0}', space=vmem, size = 0x1000, scoped, tag = 'output window, operand 0, single buffered']
    #allocation3 [shape = 's32[1]{0}', space=sflag, size = 0x4, scoped, tag = 'scoped memory for tpu_custom_call.1']
    %6 = vsyncpa [#allocation3], 0
    // Predicated region
    $region2: #{tpu_custom_call.1} parent=1 // pred_check
      _
    $region3: #{tpu_custom_call.1} parent=1 // pred_check_branch
      %8 = sbr.rel (0) target = $region5
    $region4: #{tpu_custom_call.1} parent=1 // pred_region
      _
    $region5: #{tpu_custom_call.1} parent=1 // pred_fallthru
      _
    %v9 = vld [vmem:[%s0] sm:$0x3f]
    %vm10 = vcmask 29696
    %11 = vst.msk [vmem:[#allocation2] sm:$0x3f] %vm10, %v9
    %v12 = vld [vmem:[%s0] sm:$0x3f]
    %14 = vrot.lane.b32.xlu0 %v12, 4
    %v15 = vpop.permute.xlu0 %14
    %vm17 = vcmask 62496
    %18 = vst.msk [vmem:[#allocation2] sm:$0x3f] %vm17, %v15
    // Predicated region
    $region6: #{tpu_custom_call.1} parent=1 // pred_check
      _
    $region7: #{tpu_custom_call.1} parent=1 // pred_check_branch
      %20 = sbr.rel (0) target = $region9
    $region8: #{tpu_custom_call.1} parent=1 // pred_region
      %s22 = ssub.s32 128, 128
      %23 = vsyncadd [#allocation3], %s22
      %s25 = sshll.u32 [#allocation2], 4
      %s26 = int_to_ptr.vmem [resolvable:$true] %s25
      %28 = dma.vmem_to_hbm [thread:$0]  %s26, 128, %s1, [#allocation3]
    $region9: #{tpu_custom_call.1} parent=1 // pred_fallthru
      _
    // Predicated region
    $region10: #{tpu_custom_call.1} parent=1 // pred_check
      _
    $region11: #{tpu_custom_call.1} parent=1 // pred_check_branch
      %30 = sbr.rel (0) target = $region13
    $region12: #{tpu_custom_call.1} parent=1 // pred_region
      %31 = dma.done [#allocation3], 128
    $region13: #{tpu_custom_call.1} parent=1 // pred_fallthru
      _
    %32 = vsyncpa [#allocation3], 1

</llo_original>
